<compile_context>
chip_gen: v7x
topology: tpu7x:2x2x1
jax: 0.10.0
libtpu: 0.0.40
codegen_flags: <defaults>
</compile_context>

<pallas_src>
import jax
import jax.numpy as jnp
from jax.experimental import pallas as pl
from jax.experimental.pallas import tpu as pltpu


_VMEM_LIMIT_BYTES = 48 * 1024 * 1024  # below v7x's 64 MiB physical VMEM


def _pick_tile(dim, cap, quantum):
    """Largest tile <= cap that divides `dim` and is a multiple of `quantum`
    (or equal to the full dim)."""
    t = min(cap, dim)
    while t > 1:
        if dim % t == 0 and (t % quantum == 0 or t == dim):
            return t
        t -= 1
    return dim


# ------------------------------------------------------------------ Pallas kernels

def _gen_fused_kernel(x_ref, w_ref, labels_ref,
                      logits_ref, loss_ref, valid_ref,
                      m_sc, s_sc, ll_sc):
    """Fused generator vocab projection + softmax cross-entropy.

    Grid = (tokens // tm [parallel], vocab // tn [arbitrary / reduction]).
    x: (tm, H) f32, w: (H, tn) f32, labels: (tm, 1) int32 (-100 == ignore).
    """
    j = pl.program_id(1)

    @pl.when(j == 0)
    def _():
        m_sc[...] = jnp.full_like(m_sc, -jnp.inf)
        s_sc[...] = jnp.zeros_like(s_sc)
        ll_sc[...] = jnp.zeros_like(ll_sc)

    # MXU matmul: bf16 inputs, f32 accumulation.
    logits = jnp.dot(x_ref[...].astype(jnp.bfloat16),
                     w_ref[...].astype(jnp.bfloat16),
                     preferred_element_type=jnp.float32)          # (tm, tn)
    logits_ref[...] = logits

    labels = labels_ref[...]                                      # (tm, 1) int32
    tn = logits.shape[-1]

    # Online logsumexp over the vocab (reduction) grid axis.
    tile_max = jnp.max(logits, axis=-1, keepdims=True)
    m_new = jnp.maximum(m_sc[...], tile_max)
    s_sc[...] = (s_sc[...] * jnp.exp(m_sc[...] - m_new)
                 + jnp.sum(jnp.exp(logits - m_new), axis=-1, keepdims=True))
    m_sc[...] = m_new

    # Accumulate the logit at the label column (global column index).
    # labels == -100 never matches a column index >= 0; the loss is further
    # masked by `valid`, so the ignore_index invariant is preserved.
    col = jax.lax.broadcasted_iota(jnp.int32, logits.shape, 1) + j * tn
    onehot = (col == labels).astype(jnp.float32)
    ll_sc[...] += jnp.sum(logits * onehot, axis=-1, keepdims=True)

    @pl.when(j == pl.num_programs(1) - 1)
    def _():
        valid = (labels != -100).astype(jnp.float32)
        lse = m_sc[...] + jnp.log(s_sc[...])
        loss_ref[...] = (lse - ll_sc[...]) * valid
        valid_ref[...] = valid


def generator_head_and_xent(x, w, labels, *, tm_cap=512, tn_cap=512):
    """x:(N,H) f32 token embeddings, w:(H,V) f32, labels:(N,) int (-100 ignore).

    Returns (logits (N,V) f32, per_token_loss (N,1) f32, valid (N,1) f32).
    """
    N, H = x.shape
    H2, V = w.shape
    assert H == H2
    tm = _pick_tile(N, tm_cap, 8)
    tn = _pick_tile(V, tn_cap, 128)
    labels2d = labels.reshape(N, 1).astype(jnp.int32)

    cost = pl.CostEstimate(
        flops=2 * N * H * V,
        transcendentals=N * V,
        bytes_accessed=4 * (N * H + H * V + N * V + 3 * N),
    )

    return pl.pallas_call(
        _gen_fused_kernel,
        out_shape=(jax.ShapeDtypeStruct((N, V), jnp.float32),
                   jax.ShapeDtypeStruct((N, 1), jnp.float32),
                   jax.ShapeDtypeStruct((N, 1), jnp.float32)),
        grid_spec=pltpu.PrefetchScalarGridSpec(
            num_scalar_prefetch=0,
            grid=(N // tm, V // tn),
            in_specs=[
                pl.BlockSpec((tm, H), lambda i, j: (i, 0)),
                pl.BlockSpec((H, tn), lambda i, j: (0, j)),
                pl.BlockSpec((tm, 1), lambda i, j: (i, 0)),
            ],
            out_specs=[
                pl.BlockSpec((tm, tn), lambda i, j: (i, j)),
                pl.BlockSpec((tm, 1), lambda i, j: (i, 0)),
                pl.BlockSpec((tm, 1), lambda i, j: (i, 0)),
            ],
            scratch_shapes=[pltpu.VMEM((tm, 1), jnp.float32)] * 3,
        ),
        compiler_params=pltpu.CompilerParams(
            dimension_semantics=("parallel", "arbitrary"),
            vmem_limit_bytes=_VMEM_LIMIT_BYTES),
        cost_estimate=cost,
    )(x, w, labels2d)


def _disc_fused_kernel(x_ref, w_ref, labels_ref, active_ref,
                       logits_ref, bce_ref):
    """Discriminator head (VPU dot-product, NOT an MXU GEMV) fused with BCE."""
    x = x_ref[...]                                   # (tm, H) f32
    w = w_ref[...]                                   # (1, H)  f32
    logit = jnp.sum(x * w, axis=-1, keepdims=True)   # VPU mul + lane reduce
    logits_ref[...] = logit

    y = labels_ref[...]                              # (tm, 1) f32
    act = active_ref[...]                            # (tm, 1) f32
    # numerically stable BCE-with-logits, masked by the attention mask
    bce = (jnp.maximum(logit, 0.0) - logit * y
           + jnp.log1p(jnp.exp(-jnp.abs(logit))))
    bce_ref[...] = bce * act


def discriminator_head_and_bce(x, w_col, disc_labels, active, *, tm_cap=512):
    """x:(N,H) f32, w_col:(H,1) f32, disc_labels:(N,), active:(N,).

    Returns (disc_logits (N,1) f32, masked bce terms (N,1) f32).
    """
    N, H = x.shape
    tm = _pick_tile(N, tm_cap, 8)
    w_row = w_col.reshape(1, H).astype(jnp.float32)
    labels2d = disc_labels.reshape(N, 1).astype(jnp.float32)
    active2d = active.reshape(N, 1).astype(jnp.float32)

    return pl.pallas_call(
        _disc_fused_kernel,
        out_shape=(jax.ShapeDtypeStruct((N, 1), jnp.float32),
                   jax.ShapeDtypeStruct((N, 1), jnp.float32)),
        grid_spec=pltpu.PrefetchScalarGridSpec(
            num_scalar_prefetch=0,
            grid=(N // tm,),
            in_specs=[
                pl.BlockSpec((tm, H), lambda i: (i, 0)),
                pl.BlockSpec((1, H), lambda i: (0, 0)),
                pl.BlockSpec((tm, 1), lambda i: (i, 0)),
                pl.BlockSpec((tm, 1), lambda i: (i, 0)),
            ],
            out_specs=[
                pl.BlockSpec((tm, 1), lambda i: (i, 0)),
                pl.BlockSpec((tm, 1), lambda i: (i, 0)),
            ],
        ),
        compiler_params=pltpu.CompilerParams(
            dimension_semantics=("parallel",),
            vmem_limit_bytes=_VMEM_LIMIT_BYTES),
    )(x, w_row, labels2d, active2d)


# ------------------------------------------------------------------ model glue

def _log(t, eps=1e-9):
    return jnp.log(t + eps)


def gumbel_noise(key, shape):
    u = jax.random.uniform(key, shape, minval=0.0, maxval=1.0)
    return -_log(-_log(u))


def gumbel_sample(logits, key, temperature=1.0):
    return jnp.argmax(logits / temperature + gumbel_noise(key, logits.shape),
                      axis=-1)


def electra_forward(params, input_ids, attention_mask, labels, sample_key,
                    gen_weight=1.0, disc_weight=50.0):
    B, S = input_ids.shape
    N = B * S
    V, H = params["gen_embed"].shape

    # ---- generator forward + CE loss (fused matmul + online-softmax-CE) ----
    # TODO(synk): fold the embedding gather into the kernel (scalar-prefetched
    # token ids + row gather) to avoid materializing the (N, H) activations.
    gen_x = jnp.take(params["gen_embed"], input_ids.reshape(-1), axis=0)  # (N, H)
    gen_logits_flat, per_tok_loss, valid = generator_head_and_xent(
        gen_x, params["gen_head"], labels.reshape(-1))
    gen_logits = gen_logits_flat.reshape(B, S, V)
    generator_loss = jnp.sum(per_tok_loss) / jnp.maximum(jnp.sum(valid), 1.0)

    # ---- build discriminator inputs (no-grad section in torch) ----
    masked = labels != -100                                               # (B, S)
    sampled_tokens = gumbel_sample(gen_logits, sample_key)                # (B, S)
    disc_input_ids = jnp.where(masked, sampled_tokens, input_ids)
    disc_labels = jnp.where(masked,
                            (sampled_tokens != labels).astype(jnp.float32),
                            0.0)                                          # (B, S)

    # ---- discriminator forward + BCE (VPU dot product fused with BCE) ----
    disc_x = jnp.take(params["disc_embed"], disc_input_ids.reshape(-1), axis=0)
    active = (attention_mask.reshape(-1) == 1).astype(jnp.float32)        # (N,)
    disc_logits_flat, bce_active = discriminator_head_and_bce(
        disc_x, params["disc_head"], disc_labels.reshape(-1), active)
    disc_logits = disc_logits_flat.reshape(B, S)
    discriminator_loss = jnp.sum(bce_active) / jnp.maximum(jnp.sum(active), 1.0)

    loss = gen_weight * generator_loss + disc_weight * discriminator_loss

    # ---- metrics (no-grad) ----
    num_tokens = N
    gen_predictions = jnp.argmax(gen_logits, axis=-1)
    disc_predictions = jnp.round((jnp.sign(disc_logits) + 1.0) * 0.5)
    n_masked = jnp.maximum(jnp.sum(masked.astype(jnp.float32)), 1.0)
    n_unmasked = jnp.maximum(jnp.sum((~masked).astype(jnp.float32)), 1.0)
    gen_acc = jnp.sum(jnp.where(masked, labels == gen_predictions, False)
                      .astype(jnp.float32)) / n_masked
    masked_disc_acc = jnp.sum(jnp.where(masked, disc_labels == disc_predictions,
                                        False).astype(jnp.float32)) / n_masked
    unmasked_disc_acc = jnp.sum(jnp.where(~masked, disc_labels == disc_predictions,
                                          False).astype(jnp.float32)) / n_unmasked
    disc_ones_ratio = jnp.sum(disc_labels) / num_tokens

    return {
        "loss": loss,
        "generator_loss": generator_loss,
        "discriminator_loss": discriminator_loss,
        "gen_acc": gen_acc,
        "masked_disc_acc": masked_disc_acc,
        "unmasked_disc_acc": unmasked_disc_acc,
        "disc_ones_ratio": disc_ones_ratio,
    }


# ------------------------------------------------------------------ main

if __name__ == "__main__":
    B, S, V, H = 2, 8, 256, 32
    key = jax.random.PRNGKey(0)
    k_ge, k_gh, k_de, k_dh, k_ids, k_samp = jax.random.split(key, 6)

    params = {
        "gen_embed": jax.random.normal(k_ge, (V, H), jnp.float32) * 0.02,
        "gen_head": jax.random.normal(k_gh, (H, V), jnp.float32) * 0.02,
        "disc_embed": jax.random.normal(k_de, (V, H), jnp.float32) * 0.02,
        "disc_head": jax.random.normal(k_dh, (H, 1), jnp.float32) * 0.02,
    }

    input_ids = jax.random.randint(k_ids, (B, S), 0, V, dtype=jnp.int32)
    # deterministic MLM mask pattern: every 3rd token is masked
    mask_pattern = (jnp.arange(B * S).reshape(B, S) % 3) == 0
    labels = jnp.where(mask_pattern, input_ids, -100).astype(jnp.int32)
    # attention mask: all ones except last two tokens of second sequence
    attention_mask = jnp.ones((B, S), jnp.int32).at[1, -2:].set(0)

    out = electra_forward(params, input_ids, attention_mask, labels, k_samp)
    out = jax.tree_util.tree_map(jax.block_until_ready, out)
    print("KERNEL_OK")
</pallas_src>

<mosaic_0001>
module attributes {stable_mosaic.version = 11 : i64} {
  func.func @_gen_fused_kernel(%arg0: i32, %arg1: i32, %arg2: memref<16x32xf32, #tpu.memory_space<vmem>>, %arg3: memref<32x256xf32, #tpu.memory_space<vmem>>, %arg4: memref<16x1xi32, #tpu.memory_space<vmem>>, %arg5: memref<16x256xf32, #tpu.memory_space<vmem>>, %arg6: memref<16x1xf32, #tpu.memory_space<vmem>>, %arg7: memref<16x1xf32, #tpu.memory_space<vmem>>, %arg8: memref<16x1xf32, #tpu.memory_space<vmem>>, %arg9: memref<16x1xf32, #tpu.memory_space<vmem>>, %arg10: memref<16x1xf32, #tpu.memory_space<vmem>>) attributes {dimension_semantics = [#tpu.dimension_semantics<parallel>, #tpu.dimension_semantics<arbitrary>], iteration_bounds = array<i64: 1, 1>, scalar_prefetch = 0 : i64, scratch_operands = 3 : i64, tpu.core_type = #tpu.core_type<tc>, window_params = [{transform_indices = @transform_0, window_bounds = array<i64: 16, 32>}, {transform_indices = @transform_1, window_bounds = array<i64: 32, 256>}, {transform_indices = @transform_2, window_bounds = array<i64: 16, 1>}, {transform_indices = @transform_3, window_bounds = array<i64: 16, 256>}, {transform_indices = @transform_4, window_bounds = array<i64: 16, 1>}, {transform_indices = @transform_5, window_bounds = array<i64: 16, 1>}]} {
    %c0_i32 = arith.constant 0 : i32
    %0 = arith.cmpi eq, %arg1, %c0_i32 : i32
    %1 = arith.extui %0 : i1 to i32
    %c0_i32_0 = arith.constant 0 : i32
    %2 = arith.cmpi ne, %1, %c0_i32_0 : i32
    scf.if %2 {
      %cst_27 = arith.constant 0xFF800000 : f32
      %44 = vector.broadcast %cst_27 : f32 to vector<16x1xf32>
      %c0_28 = arith.constant 0 : index
      %c0_29 = arith.constant 0 : index
      %45 = vector.load %arg8[%c0_28, %c0_29] : memref<16x1xf32, #tpu.memory_space<vmem>>, vector<16x1xf32>
      tpu.vector_store %arg8[%c0_28, %c0_29], %44 {strides = array<i32>} : memref<16x1xf32, #tpu.memory_space<vmem>>, vector<16x1xf32>,
      %cst_30 = arith.constant 0.000000e+00 : f32
      %46 = vector.broadcast %cst_30 : f32 to vector<16x1xf32>
      %c0_31 = arith.constant 0 : index
      %c0_32 = arith.constant 0 : index
      %47 = vector.load %arg9[%c0_31, %c0_32] : memref<16x1xf32, #tpu.memory_space<vmem>>, vector<16x1xf32>
      tpu.vector_store %arg9[%c0_31, %c0_32], %46 {strides = array<i32>} : memref<16x1xf32, #tpu.memory_space<vmem>>, vector<16x1xf32>,
      %cst_33 = arith.constant 0.000000e+00 : f32
      %48 = vector.broadcast %cst_33 : f32 to vector<16x1xf32>
      %c0_34 = arith.constant 0 : index
      %c0_35 = arith.constant 0 : index
      %49 = vector.load %arg10[%c0_34, %c0_35] : memref<16x1xf32, #tpu.memory_space<vmem>>, vector<16x1xf32>
      tpu.vector_store %arg10[%c0_34, %c0_35], %48 {strides = array<i32>} : memref<16x1xf32, #tpu.memory_space<vmem>>, vector<16x1xf32>,
    } else {
    }
    %c0 = arith.constant 0 : index
    %c0_1 = arith.constant 0 : index
    %3 = vector.load %arg2[%c0, %c0_1] : memref<16x32xf32, #tpu.memory_space<vmem>>, vector<16x32xf32>
    %4 = arith.truncf %3 : vector<16x32xf32> to vector<16x32xbf16>
    %c0_2 = arith.constant 0 : index
    %c0_3 = arith.constant 0 : index
    %5 = vector.load %arg3[%c0_2, %c0_3] : memref<32x256xf32, #tpu.memory_space<vmem>>, vector<32x256xf32>
    %6 = arith.truncf %5 : vector<32x256xf32> to vector<32x256xbf16>
    %cst = arith.constant dense<0.000000e+00> : vector<16x256xf32>
    %7 = tpu.matmul %4, %6, %cst {dimension_numbers = #tpu.dot_dimension_numbers<[1], [0], [0], [1], [0, 0, 1, 1], [], []>} : vector<16x32xbf16>, vector<32x256xbf16>, vector<16x256xf32> -> vector<16x256xf32>
    %c0_4 = arith.constant 0 : index
    %c0_5 = arith.constant 0 : index
    %8 = vector.load %arg5[%c0_4, %c0_5] : memref<16x256xf32, #tpu.memory_space<vmem>>, vector<16x256xf32>
    tpu.vector_store %arg5[%c0_4, %c0_5], %7 {strides = array<i32>} : memref<16x256xf32, #tpu.memory_space<vmem>>, vector<16x256xf32>,
    %c0_6 = arith.constant 0 : index
    %c0_7 = arith.constant 0 : index
    %9 = vector.load %arg4[%c0_6, %c0_7] : memref<16x1xi32, #tpu.memory_space<vmem>>, vector<16x1xi32>
    %cst_8 = arith.constant dense<0xFF800000> : vector<16xf32>
    %10 = vector.multi_reduction <maximumf>, %7, %cst_8 [1] : vector<16x256xf32> to vector<16xf32>
    %11 = vector.shape_cast %10 : vector<16xf32> to vector<16x1xf32>
    %c0_9 = arith.constant 0 : index
    %c0_10 = arith.constant 0 : index
    %12 = vector.load %arg8[%c0_9, %c0_10] : memref<16x1xf32, #tpu.memory_space<vmem>>, vector<16x1xf32>
    %13 = arith.maximumf %12, %11 : vector<16x1xf32>
    %c0_11 = arith.constant 0 : index
    %c0_12 = arith.constant 0 : index
    %14 = vector.load %arg9[%c0_11, %c0_12] : memref<16x1xf32, #tpu.memory_space<vmem>>, vector<16x1xf32>
    %c0_13 = arith.constant 0 : index
    %c0_14 = arith.constant 0 : index
    %15 = vector.load %arg8[%c0_13, %c0_14] : memref<16x1xf32, #tpu.memory_space<vmem>>, vector<16x1xf32>
    %16 = arith.subf %15, %13 : vector<16x1xf32>
    %17 = math.exp %16 : vector<16x1xf32>
    %18 = arith.mulf %14, %17 : vector<16x1xf32>
    %19 = vector.broadcast %13 : vector<16x1xf32> to vector<16x256xf32>
    %20 = arith.subf %7, %19 : vector<16x256xf32>
    %21 = math.exp %20 : vector<16x256xf32>
    %cst_15 = arith.constant dense<0.000000e+00> : vector<16xf32>
    %22 = vector.multi_reduction <add>, %21, %cst_15 [1] : vector<16x256xf32> to vector<16xf32>
    %23 = vector.shape_cast %22 : vector<16xf32> to vector<16x1xf32>
    %24 = arith.addf %18, %23 : vector<16x1xf32>
    %c0_16 = arith.constant 0 : index
    %c0_17 = arith.constant 0 : index
    %25 = vector.load %arg9[%c0_16, %c0_17] : memref<16x1xf32, #tpu.memory_space<vmem>>, vector<16x1xf32>
    tpu.vector_store %arg9[%c0_16, %c0_17], %24 {strides = array<i32>} : memref<16x1xf32, #tpu.memory_space<vmem>>, vector<16x1xf32>,
    %c0_18 = arith.constant 0 : index
    %c0_19 = arith.constant 0 : index
    %26 = vector.load %arg8[%c0_18, %c0_19] : memref<16x1xf32, #tpu.memory_space<vmem>>, vector<16x1xf32>
    tpu.vector_store %arg8[%c0_18, %c0_19], %13 {strides = array<i32>} : memref<16x1xf32, #tpu.memory_space<vmem>>, vector<16x1xf32>,
    %27 = tpu.iota {dimensions = array<i32: 1>} : vector<16x256xi32>
    %c256_i32 = arith.constant 256 : i32
    %28 = arith.muli %arg1, %c256_i32 : i32
    %29 = vector.broadcast %28 : i32 to vector<16x256xi32>
    %30 = arith.addi %27, %29 : vector<16x256xi32>
    %31 = vector.broadcast %9 : vector<16x1xi32> to vector<16x256xi32>
    %32 = arith.cmpi eq, %30, %31 : vector<16x256xi32>
    %33 = arith.extui %32 : vector<16x256xi1> to vector<16x256xi32>
    %34 = arith.sitofp %33 : vector<16x256xi32> to vector<16x256xf32>
    %c0_20 = arith.constant 0 : index
    %c0_21 = arith.constant 0 : index
    %35 = vector.load %arg10[%c0_20, %c0_21] : memref<16x1xf32, #tpu.memory_space<vmem>>, vector<16x1xf32>
    %36 = arith.mulf %7, %34 : vector<16x256xf32>
    %cst_22 = arith.constant dense<0.000000e+00> : vector<16xf32>
    %37 = vector.multi_reduction <add>, %36, %cst_22 [1] : vector<16x256xf32> to vector<16xf32>
    %38 = vector.shape_cast %37 : vector<16xf32> to vector<16x1xf32>
    %39 = arith.addf %35, %38 : vector<16x1xf32>
    %c0_23 = arith.constant 0 : index
    %c0_24 = arith.constant 0 : index
    %40 = vector.load %arg10[%c0_23, %c0_24] : memref<16x1xf32, #tpu.memory_space<vmem>>, vector<16x1xf32>
    tpu.vector_store %arg10[%c0_23, %c0_24], %39 {strides = array<i32>} : memref<16x1xf32, #tpu.memory_space<vmem>>, vector<16x1xf32>,
    %c0_i32_25 = arith.constant 0 : i32
    %41 = arith.cmpi eq, %arg1, %c0_i32_25 : i32
    %42 = arith.extui %41 : i1 to i32
    %c0_i32_26 = arith.constant 0 : i32
    %43 = arith.cmpi ne, %42, %c0_i32_26 : i32
    scf.if %43 {
      %c-100_i32 = arith.constant -100 : i32
      %44 = vector.broadcast %c-100_i32 : i32 to vector<16x1xi32>
      %45 = arith.cmpi ne, %9, %44 : vector<16x1xi32>
      %46 = arith.extui %45 : vector<16x1xi1> to vector<16x1xi32>
      %47 = arith.sitofp %46 : vector<16x1xi32> to vector<16x1xf32>
      %c0_27 = arith.constant 0 : index
      %c0_28 = arith.constant 0 : index
      %48 = vector.load %arg8[%c0_27, %c0_28] : memref<16x1xf32, #tpu.memory_space<vmem>>, vector<16x1xf32>
      %c0_29 = arith.constant 0 : index
      %c0_30 = arith.constant 0 : index
      %49 = vector.load %arg9[%c0_29, %c0_30] : memref<16x1xf32, #tpu.memory_space<vmem>>, vector<16x1xf32>
      %50 = math.log %49 : vector<16x1xf32>
      %51 = arith.addf %48, %50 : vector<16x1xf32>
      %c0_31 = arith.constant 0 : index
      %c0_32 = arith.constant 0 : index
      %52 = vector.load %arg10[%c0_31, %c0_32] : memref<16x1xf32, #tpu.memory_space<vmem>>, vector<16x1xf32>
      %53 = arith.subf %51, %52 : vector<16x1xf32>
      %54 = arith.mulf %53, %47 : vector<16x1xf32>
      %c0_33 = arith.constant 0 : index
      %c0_34 = arith.constant 0 : index
      %55 = vector.load %arg6[%c0_33, %c0_34] : memref<16x1xf32, #tpu.memory_space<vmem>>, vector<16x1xf32>
      tpu.vector_store %arg6[%c0_33, %c0_34], %54 {strides = array<i32>} : memref<16x1xf32, #tpu.memory_space<vmem>>, vector<16x1xf32>,
      %c0_35 = arith.constant 0 : index
      %c0_36 = arith.constant 0 : index
      %56 = vector.load %arg7[%c0_35, %c0_36] : memref<16x1xf32, #tpu.memory_space<vmem>>, vector<16x1xf32>
      tpu.vector_store %arg7[%c0_35, %c0_36], %47 {strides = array<i32>} : memref<16x1xf32, #tpu.memory_space<vmem>>, vector<16x1xf32>,
    } else {
    }
    return
  }
  func.func @transform_0(%arg0: i32, %arg1: i32) -> (i32, i32) {
    %c0_i32 = arith.constant 0 : i32
    %c0_i32_0 = arith.constant 0 : i32
    return %arg0, %c0_i32 : i32, i32
  }
  func.func @transform_1(%arg0: i32, %arg1: i32) -> (i32, i32) {
    %c0_i32 = arith.constant 0 : i32
    %c0_i32_0 = arith.constant 0 : i32
    return %c0_i32, %arg1 : i32, i32
  }
  func.func @transform_2(%arg0: i32, %arg1: i32) -> (i32, i32) {
    %c0_i32 = arith.constant 0 : i32
    %c0_i32_0 = arith.constant 0 : i32
    return %arg0, %c0_i32 : i32, i32
  }
  func.func @transform_3(%arg0: i32, %arg1: i32) -> (i32, i32) {
    %c0_i32 = arith.constant 0 : i32
    return %arg0, %arg1 : i32, i32
  }
  func.func @transform_4(%arg0: i32, %arg1: i32) -> (i32, i32) {
    %c0_i32 = arith.constant 0 : i32
    %c0_i32_0 = arith.constant 0 : i32
    return %arg0, %c0_i32 : i32, i32
  }
  func.func @transform_5(%arg0: i32, %arg1: i32) -> (i32, i32) {
    %c0_i32 = arith.constant 0 : i32
    %c0_i32_0 = arith.constant 0 : i32
    return %arg0, %c0_i32 : i32, i32
  }
}

</mosaic_0001>

<llo_original>
// kernel: tpu_custom_call.1
$region0: #{tpu_custom_call.1}
  #allocation0 [shape = 'u32[]', space=smem, size = 0x4, offset = 0x4, fixed_abs, tag = 'smem constant byte address 0x4 - core index']
  #allocation1 [shape = 'u32[144,128]{1,0:T(1,128)}', space=vmem, size = 0x12000, scoped, tag = 'internal scratch']
  #allocation2 [shape = 'f32[16,1]{1,0:T(8,128)}', space=vmem, size = 0x2000, scoped, tag = 'scratch operand']
  #allocation3 [shape = 'f32[16,1]{1,0:T(8,128)}', space=vmem, size = 0x2000, scoped, tag = 'scratch operand']
  #allocation4 [shape = 'f32[16,1]{1,0:T(8,128)}', space=vmem, size = 0x2000, scoped, tag = 'scratch operand']
  %s0 = inlined_call_operand.vmem [shape: f32[16,32], index: 0, kind: input, shape index: {}]
  %s1 = inlined_call_operand.hbm [shape: f32[32,256], index: 1, kind: input, shape index: {}]
  %s2 = inlined_call_operand.vmem [shape: s32[16,1], index: 2, kind: input, shape index: {}]
  %s3 = inlined_call_operand.hbm [shape: f32[16,256], index: 3, kind: output, shape index: {0}]
  %s4 = inlined_call_operand.vmem [shape: f32[16,1], index: 4, kind: output, shape index: {1}]
  %s5 = inlined_call_operand.vmem [shape: f32[16,1], index: 5, kind: output, shape index: {2}]
  %6 = xla_tuple %s3, %s4, %s5
  %s7 = sld [smem:[#allocation0]]
  $region50: #{tpu_custom_call.1} parent=0
    _
  %s9 = ssub.s32 1, %s7
  %s10 = scalar_select 0, %s9, %s7
  $region1: #{tpu_custom_call.1} parent=0
    #allocation5 [shape = 'u8[32768]{0}', space=vmem, size = 0x8000, scoped, tag = 'input window, operand 1, single buffered']
    #allocation6 [shape = 's32[1]{0}', space=sflag, size = 0x4, scoped, tag = 'scoped memory for tpu_custom_call.1']
    #allocation7 [shape = 's32[1]{0}', space=sflag, size = 0x4, scoped, tag = 'scoped memory for tpu_custom_call.1']
    #allocation8 [shape = 'u8[16384]{0}', space=vmem, size = 0x4000, scoped, tag = 'output window, operand 0, single buffered']
    %11 = vsyncpa [#allocation6], 0
    %12 = vsyncpa [#allocation7], 0
    // Predicated region
    $region2: #{tpu_custom_call.1} parent=1 // pred_check
      _
    $region3: #{tpu_custom_call.1} parent=1 // pred_check_branch
      %14 = sbr.rel (0) target = $region5
    $region4: #{tpu_custom_call.1} parent=1 // pred_region
      _
    $region5: #{tpu_custom_call.1} parent=1 // pred_fallthru
      _
    // Predicated region
    $region6: #{tpu_custom_call.1} parent=1 // pred_check
      _
    $region7: #{tpu_custom_call.1} parent=1 // pred_check_branch
      %16 = sbr.rel (0) target = $region9
    $region8: #{tpu_custom_call.1} parent=1 // pred_region
      %s18 = ssub.s32 1024, 1024
      %19 = vsyncadd [#allocation6], %s18
      %s20 = sshll.u32 [#allocation5], 4
      %s21 = int_to_ptr.vmem [resolvable:$true] %s20
      %26 = dma.hbm_to_vmem [thread:$0]  %s1, 1024, %s21, [#allocation6], 256, 256, 16
    $region9: #{tpu_custom_call.1} parent=1 // pred_fallthru
      _
    // Predicated region
    $region10: #{tpu_custom_call.1} parent=1 // pred_check
      _
    $region11: #{tpu_custom_call.1} parent=1 // pred_check_branch
      %28 = sbr.rel (0) target = $region13
    $region12: #{tpu_custom_call.1} parent=1 // pred_region
      _
    $region13: #{tpu_custom_call.1} parent=1 // pred_fallthru
      _
    // Predicated region
    $region14: #{tpu_custom_call.1} parent=1 // pred_check
      _
    $region15: #{tpu_custom_call.1} parent=1 // pred_check_branch
      %30 = sbr.rel (0) target = $region17
    $region16: #{tpu_custom_call.1} parent=1 // pred_region
      %31 = dma.done [#allocation6], 1024
    $region17: #{tpu_custom_call.1} parent=1 // pred_fallthru
      _
    %p33 = scmp.eq.s32.totalorder 0, 0
    // Predicated region
    $region18: #{tpu_custom_call.1} parent=1 // pred_check
      %p34 = pneg %p33
    $region19: #{tpu_custom_call.1} parent=1 // pred_check_branch
      %36 = sbr.rel (%p34) target = $region21
    $region20: #{tpu_custom_call.1} parent=1 // pred_region
      %vm37 = vcmask 7168
      %38 = vst.msk [vmem:[#allocation2] sm:$0xff] %vm37, -inf
      %39 = vst.msk [vmem:[#allocation2 + $0x8] sm:$0xff] %vm37, -inf
      %40 = vst.msk [vmem:[#allocation3] sm:$0xff] %vm37, 0.0
      %41 = vst.msk [vmem:[#allocation3 + $0x8] sm:$0xff] %vm37, 0.0
      %42 = vst.msk [vmem:[#allocation4] sm:$0xff] %vm37, 0.0
      %43 = vst.msk [vmem:[#allocation4 + $0x8] sm:$0xff] %vm37, 0.0
    $region21: #{tpu_custom_call.1} parent=1 // pred_fallthru
      _
    %v44 = vld [vmem:[%s0] sm:$0xff]
    %v45 = vld [vmem:[%s0 + $0x8] sm:$0xff]
    %v46 = vpack.c.bf16 %v45, %v44
    %v47 = vld [vmem:[#allocation5] sm:$0xff]
    %v48 = vld [vmem:[#allocation5 + $0x8] sm:$0xff]
    %v49 = vld [vmem:[#allocation5 + $0x10] sm:$0xff]
    %v50 = vld [vmem:[#allocation5 + $0x18] sm:$0xff]
    %v51 = vld [vmem:[#allocation5 + $0x20] sm:$0xff]
    %v52 = vld [vmem:[#allocation5 + $0x28] sm:$0xff]
    %v53 = vld [vmem:[#allocation5 + $0x30] sm:$0xff]
    %v54 = vld [vmem:[#allocation5 + $0x38] sm:$0xff]
    %v55 = vpack.c.bf16 %v49, %v47
    %v56 = vpack.c.bf16 %v50, %v48
    %v57 = vpack.c.bf16 %v53, %v51
    %v58 = vpack.c.bf16 %v54, %v52
    %vm59 = vcmask 261120
    %v61 = vsel %vm59, %v46, 0
    %63 = vmatprep.subr.bf16.mxu0 %v56
    %64 = vmatpush1.bf16.msra.mxu0 %v55
    %65 = vmatprep.subr.bf16.mxu0 %v58
    %66 = vmatpush1.bf16.msra.mxu0 %v57
    %67 = vmatprep.subr.bf16.mxu0 0
    %68 = vmatpush1.bf16.msra.mxu0 0
    %69 = vmatprep.subr.bf16.mxu0 0
    %70 = vmatpush1.bf16.msra.mxu0 0
    %71 = vmatprep.subr.bf16.mxu0 0
    %72 = vmatpush1.bf16.msra.mxu0 0
    %73 = vmatprep.subr.bf16.mxu0 0
    %74 = vmatpush1.bf16.msra.mxu0 0
    %75 = vmatprep.subr.bf16.mxu0 0
    %76 = vmatpush1.bf16.msra.mxu0 0
    %77 = vmatprep.subr.bf16.mxu0 0
    %78 = vmatpush1.bf16.msra.mxu0 0
    %79 = vmatprep.subr.bf16.mxu0 0
    %80 = vmatpush1.bf16.msra.mxu0 0
    %81 = vmatprep.subr.bf16.mxu0 0
    %82 = vmatpush1.bf16.msra.mxu0 0
    %83 = vmatprep.subr.bf16.mxu0 0
    %84 = vmatpush1.bf16.msra.mxu0 0
    %85 = vmatprep.subr.bf16.mxu0 0
    %86 = vmatpush1.bf16.msra.mxu0 0
    %87 = vmatprep.subr.bf16.mxu0 0
    %88 = vmatpush1.bf16.msra.mxu0 0
    %89 = vmatprep.subr.bf16.mxu0 0
    %90 = vmatpush1.bf16.msra.mxu0 0
    %91 = vmatprep.subr.bf16.mxu0 0
    %92 = vmatpush1.bf16.msra.mxu0 0
    %93 = vmatprep.subr.bf16.mxu0 0
    %94 = vmatpush1.bf16.msra.mxu0 0
    %95 = vmatprep.mubr.bf16.mxu0 0
    %96 = vmatmul.mubr.bf16.gmra.mrb[0].mxu0 %v61
    %v97 = vpop.f32.mrb[0].mxu0
    %v98 = vadd.f32 0.0, %v97
    %v99 = vpop.f32.mrb[0].mxu0
    %v100 = vadd.f32 0.0, %v99
    %v101 = vpop.f32.mrb[0].mxu0
    %v102 = vadd.f32 0.0, %v101
    %v103 = vpop.f32.mrb[0].mxu0
    %v104 = vadd.f32 0.0, %v103
    %105 = vdwg.mxu0
    %106 = vst [vmem:[#allocation8] sm:$0xff] %v98
    %107 = vst [vmem:[#allocation8 + $0x8] sm:$0xff] %v100
    %108 = vst [vmem:[#allocation8 + $0x10] sm:$0xff] %v102
    %109 = vst [vmem:[#allocation8 + $0x18] sm:$0xff] %v104
    %v110 = vld [vmem:[%s2] sm:$0xff]
    %v111 = vld [vmem:[%s2 + $0x8] sm:$0xff]
    %v112 = vmax.f32 %v98, %v100
    %113 = vmax.xlane.f32.xlu0 %v112
    %v114 = vpop.xlane.xlu0 %113
    %v115 = vmax.f32 %v102, %v104
    %116 = vmax.xlane.f32.xlu0 %v115
    %v117 = vpop.xlane.xlu0 %116
    %v118 = vld [vmem:[#allocation2] sm:$0xff]
    %v119 = vld [vmem:[#allocation2 + $0x8] sm:$0xff]
    %v120 = vmax.f32 %v118, %v114
    %v121 = vmax.f32 %v119, %v117
    %v122 = vld [vmem:[#allocation3] sm:$0xff]
    %v123 = vld [vmem:[#allocation3 + $0x8] sm:$0xff]
    %v124 = vsub.f32 %v118, %v120
    %v125 = vsub.f32 %v119, %v121
    %v126 = vmul.f32 %v124, 1.442695
    %v127 = vpow.pop %v126
    %v128 = vmul.f32 %v125, 1.442695
    %v129 = vpow.pop %v128
    %v130 = vmul.f32 %v122, %v127
    %v131 = vmul.f32 %v123, %v129
    %133 = vset.pattern.permute.xlu0 0
    %134 = vperm.xlu0 %133, %v120
    %v135 = vpop.permute.xlu0 %134
    %138 = vset.pattern.permute.xlu0 0
    %139 = vperm.xlu0 %138, %v121
    %v140 = vpop.permute.xlu0 %139
    %v142 = vsub.f32 %v98, %v135
    %v143 = vsub.f32 %v100, %v135
    %v144 = vsub.f32 %v102, %v140
    %v145 = vsub.f32 %v104, %v140
    %v146 = vmul.f32 %v142, 1.442695
    %v147 = vpow.pop %v146
    %v148 = vmul.f32 %v143, 1.442695
    %v149 = vpow.pop %v148
    %v150 = vmul.f32 %v144, 1.442695
    %v151 = vpow.pop %v150
    %v152 = vmul.f32 %v145, 1.442695
    %v153 = vpow.pop %v152
    %v154 = vadd.f32 %v147, %v149
    %155 = vadd.xlane.f32.xlu0 %v154
    %v156 = vpop.xlane.xlu0 %155
    %v157 = vadd.f32 %v151, %v153
    %158 = vadd.xlane.f32.xlu0 %v157
    %v159 = vpop.xlane.xlu0 %158
    %v160 = vadd.f32 %v130, %v156
    %v161 = vadd.f32 %v131, %v159
    %vm162 = vcmask 7168
    %163 = vst.msk [vmem:[#allocation3] sm:$0xff] %vm162, %v160
    %164 = vst.msk [vmem:[#allocation3 + $0x8] sm:$0xff] %vm162, %v161
    %165 = vst.msk [vmem:[#allocation2] sm:$0xff] %vm162, %v120
    %166 = vst.msk [vmem:[#allocation2 + $0x8] sm:$0xff] %vm162, %v121
    %v167 = vlaneseq
    %v168 = vand.u32 %v167, 127
    %v169 = vadd.s32 %v168, 128
    %s170 = smul.u32 0, 256
    %v171 = vstv %s170
    %v172 = vadd.s32 %v168, %v171
    %v173 = vadd.s32 %v169, %v171
    %174 = vset.pattern.permute.xlu0 0
    %175 = vperm.xlu0 %174, %v110
    %v176 = vpop.permute.xlu0 %175
    %177 = vset.pattern.permute.xlu0 0
    %178 = vperm.xlu0 %177, %v111
    %v179 = vpop.permute.xlu0 %178
    %vm180 = vcmp.eq.s32.totalorder %v172, %v176
    %vm181 = vcmp.eq.s32.totalorder %v173, %v176
    %vm182 = vcmp.eq.s32.totalorder %v172, %v179
    %vm183 = vcmp.eq.s32.totalorder %v173, %v179
    %v184 = vsel %vm180, 1, 0
    %v185 = vsel %vm181, 1, 0
    %v186 = vsel %vm182, 1, 0
    %v187 = vsel %vm183, 1, 0
    %v188 = vcvt.s32.f32 %v184
    %v189 = vcvt.s32.f32 %v185
    %v190 = vcvt.s32.f32 %v186
    %v191 = vcvt.s32.f32 %v187
    %v192 = vld [vmem:[#allocation4] sm:$0xff]
    %v193 = vld [vmem:[#allocation4 + $0x8] sm:$0xff]
    %v194 = vmul.f32 %v98, %v188
    %v195 = vmul.f32 %v100, %v189
    %v196 = vmul.f32 %v102, %v190
    %v197 = vmul.f32 %v104, %v191
    %v198 = vadd.f32 %v194, %v195
    %199 = vadd.xlane.f32.xlu0 %v198
    %v200 = vpop.xlane.xlu0 %199
    %v201 = vadd.f32 %v196, %v197
    %202 = vadd.xlane.f32.xlu0 %v201
    %v203 = vpop.xlane.xlu0 %202
    %v204 = vadd.f32 %v192, %v200
    %v205 = vadd.f32 %v193, %v203
    %206 = vst.msk [vmem:[#allocation4] sm:$0xff] %vm162, %v204
    %207 = vst.msk [vmem:[#allocation4 + $0x8] sm:$0xff] %vm162, %v205
    // Predicated region
    $region22: #{tpu_custom_call.1} parent=1 // pred_check
      %p208 = pneg %p33
    $region23: #{tpu_custom_call.1} parent=1 // pred_check_branch
      %210 = sbr.rel (%p208) target = $region25
    $region24: #{tpu_custom_call.1} parent=1 // pred_region
      %vm211 = vcmp.ne.s32.totalorder %v110, 4294967196
      %vm212 = vcmp.ne.s32.totalorder %v111, 4294967196
      %v213 = vsel %vm211, 1, 0
      %v214 = vsel %vm212, 1, 0
      %v215 = vcvt.s32.f32 %v213
      %v216 = vcvt.s32.f32 %v214
      %v217 = vld [vmem:[#allocation2] sm:$0xff]
      %v218 = vld [vmem:[#allocation2 + $0x8] sm:$0xff]
      %v219 = vld [vmem:[#allocation3] sm:$0xff]
      %v220 = vld [vmem:[#allocation3 + $0x8] sm:$0xff]
      %v221 = vlog2.pop %v219
      %v222 = vmul.f32 %v221, 0.6931472
      %v223 = vlog2.pop %v220
      %v224 = vmul.f32 %v223, 0.6931472
      %v225 = vadd.f32 %v217, %v222
      %v226 = vadd.f32 %v218, %v224
      %v227 = vld [vmem:[#allocation4] sm:$0xff]
      %v228 = vld [vmem:[#allocation4 + $0x8] sm:$0xff]
      %v229 = vsub.f32 %v225, %v227
      %v230 = vsub.f32 %v226, %v228
      %v231 = vmul.f32 %v229, %v215
      %v232 = vmul.f32 %v230, %v216
      %233 = vst.msk [vmem:[%s4] sm:$0xff] %vm162, %v231
      %234 = vst.msk [vmem:[%s4 + $0x8] sm:$0xff] %vm162, %v232
      %235 = vst.msk [vmem:[%s5] sm:$0xff] %vm162, %v215
      %236 = vst.msk [vmem:[%s5 + $0x8] sm:$0xff] %vm162, %v216
    $region25: #{tpu_custom_call.1} parent=1 // pred_fallthru
      _
    // Predicated region
    $region26: #{tpu_custom_call.1} parent=1 // pred_check
      _
    $region27: #{tpu_custom_call.1} parent=1 // pred_check_branch
      %238 = sbr.rel (0) target = $region29
    $region28: #{tpu_custom_call.1} parent=1 // pred_region
      %s240 = ssub.s32 512, 512
      %241 = vsyncadd [#allocation7], %s240
      %s242 = sshll.u32 [#allocation8], 4
      %s243 = int_to_ptr.vmem [resolvable:$true] %s242
      %248 = dma.vmem_to_hbm [thread:$0]  %s243, 512, %s3, [#allocation7], 256, 256, 16
    $region29: #{tpu_custom_call.1} parent=1 // pred_fallthru
      _
    // Predicated region
    $region30: #{tpu_custom_call.1} parent=1 // pred_check
      _
    $region31: #{tpu_custom_call.1} parent=1 // pred_check_branch
      %250 = sbr.rel (0) target = $region33
    $region32: #{tpu_custom_call.1} parent=1 // pred_region
      _
    $region33: #{tpu_custom_call.1} parent=1 // pred_fallthru
      _
    // Predicated region
    $region34: #{tpu_custom_call.1} parent=1 // pred_check
      _
    $region35: #{tpu_custom_call.1} parent=1 // pred_check_branch
      %252 = sbr.rel (0) target = $region37
    $region36: #{tpu_custom_call.1} parent=1 // pred_region
      _
    $region37: #{tpu_custom_call.1} parent=1 // pred_fallthru
      _
    // Predicated region
    $region38: #{tpu_custom_call.1} parent=1 // pred_check
      _
    $region39: #{tpu_custom_call.1} parent=1 // pred_check_branch
      %254 = sbr.rel (0) target = $region41
    $region40: #{tpu_custom_call.1} parent=1 // pred_region
      %255 = dma.done [#allocation7], 512
    $region41: #{tpu_custom_call.1} parent=1 // pred_fallthru
      _
    // Predicated region
    $region42: #{tpu_custom_call.1} parent=1 // pred_check
      _
    $region43: #{tpu_custom_call.1} parent=1 // pred_check_branch
      %257 = sbr.rel (0) target = $region45
    $region44: #{tpu_custom_call.1} parent=1 // pred_region
      _
    $region45: #{tpu_custom_call.1} parent=1 // pred_fallthru
      _
    // Predicated region
    $region46: #{tpu_custom_call.1} parent=1 // pred_check
      _
    $region47: #{tpu_custom_call.1} parent=1 // pred_check_branch
      %259 = sbr.rel (0) target = $region49
    $region48: #{tpu_custom_call.1} parent=1 // pred_region
      _
    $region49: #{tpu_custom_call.1} parent=1 // pred_fallthru
      _
    %260 = vsyncpa [#allocation6], 1
    %261 = vsyncpa [#allocation7], 1

</llo_original>
